<compile_context>
chip_gen: v6e
topology: v6e:2x2x1
jax: 0.10.0
libtpu: 0.0.40
codegen_flags: <defaults>
</compile_context>

<pallas_src>
import functools

import jax
import jax.numpy as jnp
from jax.experimental import pallas as pl
from jax.experimental.pallas import tpu as pltpu

EPS = 1e-10

# Below this element count the spectral path uses fused jnp (no Pallas launch).
_SPECTRAL_PALLAS_MIN_ELEMS = 1 << 15


# ----------------------------- Pallas kernel ---------------------------------

def _norm_taps_kernel(x_ref, o_ref, *, ntaps):
    # Block is either (tr, T, tl) [spatial: pixels on lanes, taps on sublanes]
    # or (tr, T) [spectral fallback]; in both cases the taps are axis=1.
    # Math in f32 in-kernel (v5e VPU/EUP have no bf16), I/O in the input dtype.
    x = x_ref[...].astype(jnp.float32)
    mean = jnp.mean(x, axis=1, keepdims=True)
    xc = x - mean
    var = jnp.sum(xc * xc, axis=1, keepdims=True) * (1.0 / (ntaps - 1))
    inv = pl.reciprocal(jnp.sqrt(var) + EPS, approx=False)
    o_ref[...] = (xc * inv).astype(o_ref.dtype)


# ----------------------------- tiling helpers ---------------------------------

def _vmem_budget():
    """Per-generation (block element budget, vmem_limit_bytes).

    Block payload (elements of the *input* dtype) is kept small enough that
    2 arrays x 2 pipeline buffers + in-kernel f32 temporaries stay well inside
    the scoped VMEM limit we request.
    """
    try:
        cap = pltpu.get_tpu_info().vmem_capacity_bytes
    except Exception:  # be safe if hardware introspection is unavailable
        cap = 64 << 20  # assume the smallest per-core VMEM (v7x)
    if cap >= (100 << 20):          # v5e / v6e: 128 MiB physical VMEM
        return 1 << 20, 64 << 20    # ~4 MiB f32 block, 64 MiB scoped limit
    return 1 << 19, 32 << 20        # v7x (64 MiB physical): ~2 MiB f32 block


def _pick_lane_tile(L, max_elems):
    """Largest multiple-of-128 divisor of L that is <= max_elems, else L.

    A full-extent last dim is always legal; otherwise the lane dim of the
    block must be a multiple of 128 (unmasked vld/vst)."""
    if L % 128 != 0:
        return L
    if L <= max_elems:
        return L
    k_max = max(1, min(L, max_elems) // 128)
    for k in range(k_max, 0, -1):
        if L % (k * 128) == 0:
            return k * 128
    return 128


def _pick_row_tile(R, max_rows):
    """Largest divisor of R that is <= max_rows (leading dim: no (8,128) rule)."""
    max_rows = max(1, min(R, max_rows))
    for tr in range(max_rows, 0, -1):
        if R % tr == 0:
            return tr
    return 1


def _pick_sublane_tile(R, max_rows):
    """Row tile for a 2-D (R, T) block: multiple of 8 or the full extent."""
    if R % 8 != 0:
        return R
    k_max = max(1, min(R, max_rows) // 8)
    for k in range(k_max, 0, -1):
        if R % (k * 8) == 0:
            return k * 8
    return 8


# ----------------------------- pallas_call wrappers ----------------------------

def _spatial_norm(x3d):
    # x3d: (R, T, L) with R = B*in_channels, T = taps, L = H*W (lanes).
    R, T, L = x3d.shape
    block_elems, vmem_limit = _vmem_budget()
    per_row = max(128, block_elems // T)          # budget for tr * tl

    tl = _pick_lane_tile(L, per_row)
    # Widen rows only when each row's pixel dim fits one tile -> fully
    # contiguous (tr, T, L) HBM slabs per grid step.
    tr = _pick_row_tile(R, max(1, per_row // tl)) if tl == L else 1

    # v7x megacore: make sure at least 2 grid steps exist on a parallel axis
    # (also lets the pipeline double-buffer).  Prefer splitting rows.
    if (R // tr) * (L // tl) < 2:
        if R >= 2:
            tr = _pick_row_tile(R, R // 2)
        elif L % 256 == 0:
            tl = _pick_lane_tile(L, L // 2)

    grid = (R // tr, L // tl)
    return pl.pallas_call(
        functools.partial(_norm_taps_kernel, ntaps=T),
        out_shape=jax.ShapeDtypeStruct((R, T, L), x3d.dtype),
        grid=grid,
        in_specs=[pl.BlockSpec((tr, T, tl), lambda r, j: (r, 0, j))],
        out_specs=pl.BlockSpec((tr, T, tl), lambda r, j: (r, 0, j)),
        compiler_params=pltpu.CompilerParams(
            dimension_semantics=("parallel", "parallel"),
            vmem_limit_bytes=vmem_limit),
    )(x3d)


def _spectral_norm_jnp(x2d, taps):
    # Tiny tensor: fused XLA expression beats a standalone Pallas launch.
    x = x2d.astype(jnp.float32)
    mean = x.mean(axis=1, keepdims=True)
    xc = x - mean
    std = jnp.sqrt(jnp.sum(xc * xc, axis=1, keepdims=True) / (taps - 1))
    return (xc / (std + EPS)).astype(x2d.dtype)


def _spectral_norm_pallas(x2d):
    # Only used when B*in_channels is large enough to amortize the launch.
    R, T = x2d.shape
    block_elems, vmem_limit = _vmem_budget()
    tr = _pick_sublane_tile(R, max(8, block_elems // T))
    grid = (R // tr,)
    return pl.pallas_call(
        functools.partial(_norm_taps_kernel, ntaps=T),
        out_shape=jax.ShapeDtypeStruct((R, T), x2d.dtype),
        grid=grid,
        in_specs=[pl.BlockSpec((tr, T), lambda r: (r, 0))],
        out_specs=pl.BlockSpec((tr, T), lambda r: (r, 0)),
        compiler_params=pltpu.CompilerParams(
            dimension_semantics=("parallel",),
            vmem_limit_bytes=vmem_limit),
    )(x2d)


# ----------------------------- forward ----------------------------------------

@functools.partial(jax.jit, static_argnames=("in_channels", "filter_type"))
def kernel_norm(x, in_channels, filter_type):
    """Pallas forward of KernelNorm(in_channels, filter_type). Preserves dtype."""
    assert filter_type in ("spatial", "spectral")
    assert in_channels >= 1
    if filter_type == "spatial":
        b, c, h, w = x.shape
        taps = c // in_channels
        # taps == 1 would make ddof=1 std undefined (torch NaNs here too).
        assert taps >= 2, "KernelNorm('spatial') needs >= 2 taps per channel"
        # contiguous reshape (no transpose): (B, in_ch, T, H, W) -> (R, T, H*W)
        x3d = x.reshape(b * in_channels, taps, h * w)
        y = _spatial_norm(x3d)
        return y.reshape(b, c, h, w)
    # 'spectral': torch returns the reshaped (b, in_ch, taps) tensor.
    b = x.shape[0]
    x3d = x.reshape(b, in_channels, -1)
    taps = x3d.shape[-1]
    assert taps >= 2, "KernelNorm('spectral') needs >= 2 taps per channel"
    x2d = x3d.reshape(b * in_channels, taps)
    if x2d.size >= _SPECTRAL_PALLAS_MIN_ELEMS:
        y = _spectral_norm_pallas(x2d)
    else:
        y = _spectral_norm_jnp(x2d, taps)
    return y.reshape(b, in_channels, taps)


def kernel_norm_ref(x, in_channels, filter_type):
    """Pure-JAX reference matching the PyTorch module (unbiased std, +1e-10)."""
    orig_dtype = x.dtype
    xf = x.astype(jnp.float32)
    if filter_type == "spatial":
        b, c, h, w = x.shape
        t = c // in_channels
        r = xf.reshape(b, in_channels, t, h, w)
        mean = r.mean(axis=2, keepdims=True)
        std = jnp.sqrt(((r - mean) ** 2).sum(axis=2, keepdims=True) / (t - 1))
        out = ((r - mean) / (std + EPS)).reshape(b, c, h, w)
        return out.astype(orig_dtype)
    b = x.shape[0]
    r = xf.reshape(b, in_channels, -1)
    t = r.shape[-1]
    mean = r.mean(axis=2, keepdims=True)
    std = jnp.sqrt(((r - mean) ** 2).sum(axis=2, keepdims=True) / (t - 1))
    return ((r - mean) / (std + EPS)).astype(orig_dtype)


# ----------------------------- main --------------------------------------------

if __name__ == "__main__":
    key = jax.random.PRNGKey(0)
    k1, k2, k3, k4 = jax.random.split(key, 4)

    B, C, H, W = 2, 4, 16, 16
    TAPS = 35  # 1*1 + 3*3 + 5*5 kernel taps, as used by KernelGenerator

    # KernelNorm('spatial', in_channels=1) on the stacked per-pixel kernels
    x_spatial = jax.random.normal(k1, (B, TAPS, H, W), jnp.float32)
    # KernelNorm('spatial', in_channels=C) generic multi-channel case (T = 9)
    x_spatial_mc = jax.random.normal(k2, (B, C * 9, H, W), jnp.float32)
    # KernelNorm('spectral', in_channels=C) on the spectral kernels
    x_spectral = jax.random.normal(k3, (B, C, TAPS), jnp.float32)
    # Larger single-channel image (exercises lane tiling / >=2 grid steps)
    x_spatial_big = jax.random.normal(k4, (1, TAPS, 64, 64), jnp.float32)
    # bf16 input (exercises in-kernel f32 cast with bf16 I/O, dtype preserved)
    x_spatial_bf16 = x_spatial.astype(jnp.bfloat16)

    cases = [
        (x_spatial, 1, "spatial", 1e-5),
        (x_spatial_mc, C, "spatial", 1e-5),
        (x_spectral, C, "spectral", 1e-5),
        (x_spatial_big, 1, "spatial", 1e-5),
        (x_spatial_bf16, 1, "spatial", 1e-2),
    ]
    for x, in_ch, ftype, tol in cases:
        out = jax.block_until_ready(
            kernel_norm(x, in_channels=in_ch, filter_type=ftype))
        ref = jax.block_until_ready(kernel_norm_ref(x, in_ch, ftype))
        assert out.shape == ref.shape, (ftype, in_ch, out.shape, ref.shape)
        assert out.dtype == ref.dtype, (ftype, in_ch, out.dtype, ref.dtype)
        assert jnp.allclose(out.astype(jnp.float32), ref.astype(jnp.float32),
                            atol=tol, rtol=tol), \
            f"Pallas KernelNorm mismatch for {ftype}, in_ch={in_ch}, {x.dtype}"

    print("KERNEL_OK")
</pallas_src>

<mosaic_0001>
module attributes {stable_mosaic.version = 11 : i64} {
  func.func @_norm_taps_kernel(%arg0: i32, %arg1: i32, %arg2: memref<1x35x256xf32, #tpu.memory_space<vmem>>, %arg3: memref<1x35x256xf32, #tpu.memory_space<vmem>>) attributes {dimension_semantics = [#tpu.dimension_semantics<parallel>, #tpu.dimension_semantics<parallel>], iteration_bounds = array<i64: 2, 1>, scalar_prefetch = 0 : i64, scratch_operands = 0 : i64, tpu.core_type = #tpu.core_type<tc>, window_params = [{transform_indices = @transform_0, window_bounds = array<i64: 1, 35, 256>}, {transform_indices = @transform_1, window_bounds = array<i64: 1, 35, 256>}]} {
    %c0 = arith.constant 0 : index
    %c0_0 = arith.constant 0 : index
    %c0_1 = arith.constant 0 : index
    %0 = vector.load %arg2[%c0, %c0_0, %c0_1] : memref<1x35x256xf32, #tpu.memory_space<vmem>>, vector<1x35x256xf32>
    %cst = arith.constant dense<0.000000e+00> : vector<1x256xf32>
    %1 = vector.multi_reduction <add>, %0, %cst [1] : vector<1x35x256xf32> to vector<1x256xf32>
    %2 = vector.shape_cast %1 : vector<1x256xf32> to vector<1x1x256xf32>
    %cst_2 = arith.constant 3.500000e+01 : f32
    %3 = vector.broadcast %cst_2 : f32 to vector<1x1x256xf32>
    %4 = arith.divf %2, %3 : vector<1x1x256xf32>
    %5 = vector.broadcast %4 : vector<1x1x256xf32> to vector<1x35x256xf32>
    %6 = arith.subf %0, %5 : vector<1x35x256xf32>
    %7 = arith.mulf %6, %6 : vector<1x35x256xf32>
    %cst_3 = arith.constant dense<0.000000e+00> : vector<1x256xf32>
    %8 = vector.multi_reduction <add>, %7, %cst_3 [1] : vector<1x35x256xf32> to vector<1x256xf32>
    %9 = vector.shape_cast %8 : vector<1x256xf32> to vector<1x1x256xf32>
    %cst_4 = arith.constant 0.0294117648 : f32
    %10 = vector.broadcast %cst_4 : f32 to vector<1x1x256xf32>
    %11 = arith.mulf %9, %10 : vector<1x1x256xf32>
    %12 = math.sqrt %11 : vector<1x1x256xf32>
    %cst_5 = arith.constant 1.000000e-10 : f32
    %13 = vector.broadcast %cst_5 : f32 to vector<1x1x256xf32>
    %14 = arith.addf %12, %13 : vector<1x1x256xf32>
    %15 = tpu.reciprocal %14 : vector<1x1x256xf32> -> vector<1x1x256xf32>
    %16 = vector.broadcast %15 : vector<1x1x256xf32> to vector<1x35x256xf32>
    %17 = arith.mulf %6, %16 : vector<1x35x256xf32>
    %c0_6 = arith.constant 0 : index
    %c0_7 = arith.constant 0 : index
    %c0_8 = arith.constant 0 : index
    %18 = vector.load %arg3[%c0_6, %c0_7, %c0_8] : memref<1x35x256xf32, #tpu.memory_space<vmem>>, vector<1x35x256xf32>
    tpu.vector_store %arg3[%c0_6, %c0_7, %c0_8], %17 {strides = array<i32>} : memref<1x35x256xf32, #tpu.memory_space<vmem>>, vector<1x35x256xf32>,
    return
  }
  func.func @transform_0(%arg0: i32, %arg1: i32) -> (i32, i32, i32) {
    %c0_i32 = arith.constant 0 : i32
    %c0_i32_0 = arith.constant 0 : i32
    return %arg0, %c0_i32, %arg1 : i32, i32, i32
  }
  func.func @transform_1(%arg0: i32, %arg1: i32) -> (i32, i32, i32) {
    %c0_i32 = arith.constant 0 : i32
    %c0_i32_0 = arith.constant 0 : i32
    return %arg0, %c0_i32, %arg1 : i32, i32, i32
  }
}

</mosaic_0001>

<llo_original>
// kernel: kernel_norm.1
$region0: #{kernel_norm.1}
  #allocation0 [shape = 'u32[]', space=smem, size = 0x4, offset = 0x4, fixed_abs, tag = 'smem constant byte address 0x4 - core index']
  #allocation1 [shape = 'u32[144,128]{1,0:T(1,128)}', space=vmem, size = 0x12000, scoped, tag = 'internal scratch']
  %s0 = inlined_call_operand.vmem [shape: f32[2,35,256], index: 0, kind: input, shape index: {}]
  %s1 = inlined_call_operand.vmem [shape: f32[2,35,256], index: 1, kind: output, shape index: {}]
  %s2 = sld [smem:[#allocation0]]
  $region37: #{kernel_norm.1} parent=0
    _
  %s4 = ssub.s32 1, %s2
  %s5 = scalar_select 0, %s4, %s2
  loop: start=0, step=1, limit=4
  $region2: #{kernel_norm.1} parent=0 // loop_pre_header
    _
  $region3: #{kernel_norm.1} parent=0 // loop_header
    %s7 = sphi 0, %s11
    %p8 = scmp.ge.s32.totalorder %s7, 4
    %s14 = sphi 0, %s26
    %s15 = sphi 0, %s22
    %s16 = sphi 0, %s14
    %s17 = sphi 0, %s15
    %s18 = sphi 0, %s16
    %s19 = sphi 0, %s17
    %s31 = sphi 0, %s33
    %s34 = sphi 0, %s31
    %s35 = sphi 0, %s34
    %s51 = sphi 0, %s35
    %s59 = sphi 0, %s61
    %s62 = sphi 0, %s59
    %s63 = sphi 0, %s62
    %s79 = sphi 0, %s63
  $region4: #{kernel_norm.1} parent=0 // loop_header_branch
    %10 = sbr.rel (%p8) target = $region8
  $region5: #{kernel_norm.1} parent=0 // loop_body
    %s12 = ssub.s32 %s7, 1
    %s13 = ssub.s32 %s7, 2
    %s20 = sadd.s32 1, %s15
    %p21 = scmp.ge.s32.totalorder %s20, 1
    %s22 = scalar_select %p21, 0, %s20
    %s23 = sadd.s32 1, %s14
    %s24 = scalar_select %p21, %s23, %s14
    %p25 = scmp.ge.s32.totalorder %s24, 2
    %s26 = scalar_select %p25, 0, %s24
    %s27 = ssub.s32 %s14, %s26
    %s28 = ssub.s32 %s15, %s22
    %s29 = sor.u32 %s27, %s28
    %p30 = scmp.eq.s32.totalorder %s29, 0
    %s32 = sadd.s32 %s31, 1
    %s33 = scalar_select %p30, %s31, %s32
    %p36 = pneg %p30
    %p37 = scmp.eq.s32.totalorder %s7, 1
    %p38 = por %p36, %p37
    %p39 = scmp.ne.s32.totalorder %s31, %s34
    %p40 = scmp.eq.s32.totalorder %s7, 0
    %p41 = por %p39, %p40
    %p42 = scmp.ne.s32.totalorder %s31, %s34
    %p43 = scmp.eq.s32.totalorder %s12, 1
    %p44 = por %p42, %p43
    %p45 = scmp.ne.s32.totalorder %s34, %s35
    %p46 = scmp.eq.s32.totalorder %s12, 0
    %p47 = por %p45, %p46
    %p48 = scmp.ne.s32.totalorder %s34, %s35
    %p49 = scmp.eq.s32.totalorder %s13, 1
    %p50 = por %p48, %p49
    %p52 = scmp.ne.s32.totalorder %s35, %s51
    %p53 = scmp.eq.s32.totalorder %s13, 0
    %p54 = por %p52, %p53
    %s55 = ssub.s32 %s14, %s26
    %s56 = ssub.s32 %s15, %s22
    %s57 = sor.u32 %s55, %s56
    %p58 = scmp.eq.s32.totalorder %s57, 0
    %s60 = sadd.s32 %s59, 1
    %s61 = scalar_select %p58, %s59, %s60
    %p64 = pneg %p58
    %p65 = scmp.eq.s32.totalorder %s7, 1
    %p66 = por %p64, %p65
    %p67 = scmp.ne.s32.totalorder %s59, %s62
    %p68 = scmp.eq.s32.totalorder %s7, 0
    %p69 = por %p67, %p68
    %p70 = scmp.ne.s32.totalorder %s59, %s62
    %p71 = scmp.eq.s32.totalorder %s12, 1
    %p72 = por %p70, %p71
    %p73 = scmp.ne.s32.totalorder %s62, %s63
    %p74 = scmp.eq.s32.totalorder %s12, 0
    %p75 = por %p73, %p74
    %p76 = scmp.ne.s32.totalorder %s62, %s63
    %p77 = scmp.eq.s32.totalorder %s13, 1
    %p78 = por %p76, %p77
    %p80 = scmp.ne.s32.totalorder %s63, %s79
    %p81 = scmp.eq.s32.totalorder %s13, 0
    %p82 = por %p80, %p81
    %p83 = scmp.le.s32.totalorder 1, %s7
    %p84 = scmp.lt.s32.totalorder %s7, 3
    %p85 = pnand %p83, %p84
    %p86 = pneg %p85
    // Predicated region
    $region9: #{kernel_norm.1} parent=5 // pred_check
      _
    $region10: #{kernel_norm.1} parent=5 // pred_check_branch
      %88 = sbr.rel (%p85) target = $region12
    $region11: #{kernel_norm.1} parent=5 // pred_region
      %s89 = ssub.s32 %s7, 1
    $region12: #{kernel_norm.1} parent=5 // pred_fallthru
      _
    %p90 = scmp.lt.s32.totalorder %s7, 2
    // Predicated region
    $region13: #{kernel_norm.1} parent=5 // pred_check
      %p91 = pneg %p90
    $region14: #{kernel_norm.1} parent=5 // pred_check_branch
      %93 = sbr.rel (%p91) target = $region16
    $region15: #{kernel_norm.1} parent=5 // pred_region
      // Predicated region
      $region17: #{kernel_norm.1} parent=15 // pred_check
        %p94 = pneg %p41
      $region18: #{kernel_norm.1} parent=15 // pred_check_branch
        %96 = sbr.rel (%p94) target = $region20
      $region19: #{kernel_norm.1} parent=15 // pred_region
        %s97 = smul.u32 2, %s15
        %p98 = scmp.lt.s32.totalorder %s14, 1
        %s99 = scalar_select %p98, %s14, 1
        %p100 = scmp.lt.s32.totalorder %s97, 1
        %s101 = scalar_select %p100, %s97, 1
        %s102 = smul.addr %s99, 10
        %s103 = sadd.s32 %s101, %s102
        %s104 = smul.addr %s103, 8
        %s105 = scalar_lea.vmem %s0, %s104
        %s106 = smul.u32 2, %s15
      $region20: #{kernel_norm.1} parent=15 // pred_fallthru
        _
    $region16: #{kernel_norm.1} parent=5 // pred_fallthru
      _
    %p107 = scmp.le.s32.totalorder 1, %s7
    %p108 = scmp.lt.s32.totalorder %s7, 3
    %p109 = pnand %p107, %p108
    %p110 = pneg %p109
    // Predicated region
    $region21: #{kernel_norm.1} parent=5 // pred_check
      _
    $region22: #{kernel_norm.1} parent=5 // pred_check_branch
      %112 = sbr.rel (%p109) target = $region24
    $region23: #{kernel_norm.1} parent=5 // pred_region
      %s113 = ssub.s32 %s7, 1
      %s114 = smul.u32 2, %s17
      %p115 = scmp.lt.s32.totalorder %s16, 1
      %s116 = scalar_select %p115, %s16, 1
      %p117 = scmp.lt.s32.totalorder %s114, 1
      %s118 = scalar_select %p117, %s114, 1
      %s119 = smul.addr %s116, 10
      %s120 = sadd.s32 %s118, %s119
      %s121 = smul.addr %s120, 8
      %s122 = scalar_lea.vmem %s0, %s121
      %p123 = pneg %p47
      %p124 = pneg %p44
      %p125 = pneg %p75
      %p126 = pneg %p72
      %s127 = smul.u32 2, %s17
      %p128 = scmp.lt.s32.totalorder %s16, 1
      %s129 = scalar_select %p128, %s16, 1
      %p130 = scmp.lt.s32.totalorder %s127, 1
      %s131 = scalar_select %p130, %s127, 1
      %s132 = smul.addr %s129, 10
      %s133 = sadd.s32 %s131, %s132
      %s134 = smul.addr %s133, 8
      %s135 = scalar_lea.vmem %s1, %s134
      %s136 = smul.u32 2, %s17
      %p137 = scmp.lt.s32.totalorder %s16, 1
      %s138 = scalar_select %p137, %s16, 1
      %p139 = scmp.lt.s32.totalorder %s136, 1
      %s140 = scalar_select %p139, %s136, 1
      %s141 = smul.addr %s138, 10
      %s142 = sadd.s32 %s140, %s141
      %s143 = smul.addr %s142, 8
      %s144 = scalar_lea.vmem %s0, %s143
      %s145 = smul.u32 2, %s17
      %s146 = smul.u32 2, %s17
      %p147 = scmp.lt.s32.totalorder %s16, 1
      %s148 = scalar_select %p147, %s16, 1
      %p149 = scmp.lt.s32.totalorder %s146, 1
      %s150 = scalar_select %p149, %s146, 1
      %s151 = smul.addr %s148, 10
      %s152 = sadd.s32 %s150, %s151
      %s153 = smul.addr %s152, 8
      %s154 = scalar_lea.vmem %s1, %s153
      %s155 = smul.u32 2, %s17
      %v156 = vld [vmem:[%s144] sm:$0xff]
      %v157 = vld [vmem:[%s144 + $0x8] sm:$0xff]
      %v158 = vld [vmem:[%s144 + $0x10] sm:$0xff]
      %v159 = vld [vmem:[%s144 + $0x18] sm:$0xff]
      %v160 = vld [vmem:[%s144 + $0x20] sm:$0xff]
      %v161 = vld [vmem:[%s144 + $0x28] sm:$0xff]
      %v162 = vld [vmem:[%s144 + $0x30] sm:$0xff]
      %v163 = vld [vmem:[%s144 + $0x38] sm:$0xff]
      %v164 = vld [vmem:[%s144 + $0x40] sm:$0x7]
      %v165 = vld [vmem:[%s144 + $0x48] sm:$0x7]
      %v166 = vadd.f32 %v156, %v158
      %v167 = vadd.f32 %v166, %v160
      %v168 = vadd.f32 %v167, %v162
      %vm169 = vcmask 1042432
      %v170 = vsel %vm169, %v164, 0.0
      %v171 = vadd.f32 %v168, %v170
      %v172 = vrot.slane %v171, 4
      %v173 = vadd.f32 %v171, %v172
      %v174 = vrot.slane %v173, 2
      %v175 = vadd.f32 %v173, %v174
      %v176 = vrot.slane %v175, 1
      %v177 = vadd.f32 %v175, %v176
      %v178 = vadd.f32 %v157, %v159
      %v179 = vadd.f32 %v178, %v161
      %v180 = vadd.f32 %v179, %v163
      %v181 = vsel %vm169, %v165, 0.0
      %v182 = vadd.f32 %v180, %v181
      %v183 = vrot.slane %v182, 4
      %v184 = vadd.f32 %v182, %v183
      %v185 = vrot.slane %v184, 2
      %v186 = vadd.f32 %v184, %v185
      %v187 = vrot.slane %v186, 1
      %v188 = vadd.f32 %v186, %v187
      %v189 = vrcp.pop 35.0
      %v190 = vmul.f32 %v177, %v189
      %v191 = vmul.f32 %v188, %v189
      %v192 = vsub.f32 %v156, %v190
      %v193 = vsub.f32 %v157, %v191
      %v194 = vsub.f32 %v158, %v190
      %v195 = vsub.f32 %v159, %v191
      %v196 = vsub.f32 %v160, %v190
      %v197 = vsub.f32 %v161, %v191
      %v198 = vsub.f32 %v162, %v190
      %v199 = vsub.f32 %v163, %v191
      %v200 = vsub.f32 %v164, %v190
      %v201 = vsub.f32 %v165, %v191
      %v202 = vmul.f32 %v192, %v192
      %v203 = vmul.f32 %v193, %v193
      %v204 = vmul.f32 %v194, %v194
      %v205 = vmul.f32 %v195, %v195
      %v206 = vmul.f32 %v196, %v196
      %v207 = vmul.f32 %v197, %v197
      %v208 = vmul.f32 %v198, %v198
      %v209 = vmul.f32 %v199, %v199
      %v210 = vmul.f32 %v200, %v200
      %v211 = vmul.f32 %v201, %v201
      %v212 = vadd.f32 %v202, %v204
      %v213 = vadd.f32 %v212, %v206
      %v214 = vadd.f32 %v213, %v208
      %v215 = vsel %vm169, %v210, 0.0
      %v216 = vadd.f32 %v214, %v215
      %v217 = vrot.slane %v216, 4
      %v218 = vadd.f32 %v216, %v217
      %v219 = vrot.slane %v218, 2
      %v220 = vadd.f32 %v218, %v219
      %v221 = vrot.slane %v220, 1
      %v222 = vadd.f32 %v220, %v221
      %v223 = vadd.f32 %v203, %v205
      %v224 = vadd.f32 %v223, %v207
      %v225 = vadd.f32 %v224, %v209
      %v226 = vsel %vm169, %v211, 0.0
      %v227 = vadd.f32 %v225, %v226
      %v228 = vrot.slane %v227, 4
      %v229 = vadd.f32 %v227, %v228
      %v230 = vrot.slane %v229, 2
      %v231 = vadd.f32 %v229, %v230
      %v232 = vrot.slane %v231, 1
      %v233 = vadd.f32 %v231, %v232
      %v234 = vmul.f32 %v222, 0.029411765
      %v235 = vmul.f32 %v233, 0.029411765
      %v236 = vrsqrt.pop %v234
      %v237 = vmul.f32 %v234, %v236
      %vm238 = vcmp.eq.f32.partialorder %v234, inf
      %v239 = vsel %vm238, %v234, %v237
      %vm240 = vcmp.eq.f32.partialorder %v234, 0.0
      %v241 = vand.u32 %v234, 2147483648
      %v242 = vsel %vm240, %v241, %v239
      %v243 = vrsqrt.pop %v235
      %v244 = vmul.f32 %v235, %v243
      %vm245 = vcmp.eq.f32.partialorder %v235, inf
      %v246 = vsel %vm245, %v235, %v244
      %vm247 = vcmp.eq.f32.partialorder %v235, 0.0
      %v248 = vand.u32 %v235, 2147483648
      %v249 = vsel %vm247, %v248, %v246
      %v250 = vadd.f32 %v242, 1e-10
      %v251 = vadd.f32 %v249, 1e-10
      %v252 = vrcp.pop %v250
      %v253 = vrcp.pop %v251
      %v254 = vmul.f32 %v192, %v252
      %v255 = vmul.f32 %v193, %v253
      %v256 = vmul.f32 %v194, %v252
      %v257 = vmul.f32 %v195, %v253
      %v258 = vmul.f32 %v196, %v252
      %v259 = vmul.f32 %v197, %v253
      %v260 = vmul.f32 %v198, %v252
      %v261 = vmul.f32 %v199, %v253
      %v262 = vmul.f32 %v200, %v252
      %v263 = vmul.f32 %v201, %v253
      %264 = vst [vmem:[%s154] sm:$0xff] %v254
      %265 = vst [vmem:[%s154 + $0x8] sm:$0xff] %v255
      %266 = vst [vmem:[%s154 + $0x10] sm:$0xff] %v256
      %267 = vst [vmem:[%s154 + $0x18] sm:$0xff] %v257
      %268 = vst [vmem:[%s154 + $0x20] sm:$0xff] %v258
      %269 = vst [vmem:[%s154 + $0x28] sm:$0xff] %v259
      %270 = vst [vmem:[%s154 + $0x30] sm:$0xff] %v260
      %271 = vst [vmem:[%s154 + $0x38] sm:$0xff] %v261
      %272 = vst [vmem:[%s154 + $0x40] sm:$0x7] %v262
      %273 = vst [vmem:[%s154 + $0x48] sm:$0x7] %v263
      %s274 = smul.u32 2, %s17
      %p275 = scmp.lt.s32.totalorder %s16, 1
      %s276 = scalar_select %p275, %s16, 1
      %p277 = scmp.lt.s32.totalorder %s274, 1
      %s278 = scalar_select %p277, %s274, 1
      %s279 = smul.addr %s276, 10
      %s280 = sadd.s32 %s278, %s279
      %s281 = smul.addr %s280, 8
      %s282 = scalar_lea.vmem %s1, %s281
      // Predicated region
      $region25: #{kernel_norm.1} parent=23 // pred_check
        %p283 = pneg %p72
      $region26: #{kernel_norm.1} parent=23 // pred_check_branch
        %285 = sbr.rel (%p283) target = $region28
      $region27: #{kernel_norm.1} parent=23 // pred_region
        %s286 = smul.u32 2, %s17
      $region28: #{kernel_norm.1} parent=23 // pred_fallthru
        _
    $region24: #{kernel_norm.1} parent=5 // pred_fallthru
      _
    %p287 = scmp.le.s32.totalorder 2, %s7
    // Predicated region
    $region29: #{kernel_norm.1} parent=5 // pred_check
      %p288 = pneg %p287
    $region30: #{kernel_norm.1} parent=5 // pred_check_branch
      %290 = sbr.rel (%p288) target = $region32
    $region31: #{kernel_norm.1} parent=5 // pred_region
      %s291 = ssub.s32 %s7, 2
      // Predicated region
      $region33: #{kernel_norm.1} parent=31 // pred_check
        %p292 = pneg %p78
      $region34: #{kernel_norm.1} parent=31 // pred_check_branch
        %294 = sbr.rel (%p292) target = $region36
      $region35: #{kernel_norm.1} parent=31 // pred_region
        %s295 = smul.u32 2, %s19
        %p296 = scmp.lt.s32.totalorder %s18, 1
        %s297 = scalar_select %p296, %s18, 1
        %p298 = scmp.lt.s32.totalorder %s295, 1
        %s299 = scalar_select %p298, %s295, 1
        %s300 = smul.addr %s297, 10
        %s301 = sadd.s32 %s299, %s300
        %s302 = smul.addr %s301, 8
        %s303 = scalar_lea.vmem %s1, %s302
      $region36: #{kernel_norm.1} parent=31 // pred_fallthru
        _
    $region32: #{kernel_norm.1} parent=5 // pred_fallthru
      _
  $region6: #{kernel_norm.1} parent=0 // loop_footer
    %s11 = sadd.s32 1, %s7
  $region7: #{kernel_norm.1} parent=0 // loop_footer_branch
    %6 = sbr.rel target = $region3
  $region8: #{kernel_norm.1} parent=0 // loop_exit
    _

</llo_original>
